<compile_context>
chip_gen: v7x
topology: tpu7x:2x2x1
jax: 0.10.0
libtpu: 0.0.40
codegen_flags: <defaults>
</compile_context>

<pallas_src>
import jax
import jax.numpy as jnp
from jax import lax
from jax.experimental import pallas as pl
from jax.experimental.pallas import tpu as pltpu

_LANE = 128
_SUBLANE = 8
_UNROLL_C = 64          # static-unroll threshold for the channel reduction
_TARGET_BLOCK_BYTES = 3 << 20   # ~3 MiB per block (x4 buffers ~12 MiB VMEM)
_MIN_GRID_STEPS = 8     # keep both v7x TensorCores fed


def _cdiv(a, b):
    return -(-a // b)


def _make_kernel(C):
    """Build the kernel body for a static channel count C."""
    if C <= _UNROLL_C:
        def kernel(x_ref, w_ref, b_ref, o_ref):
            # x_ref/o_ref: (1, C, S, 128) VMEM; w_ref: (C,) SMEM; b_ref: (1,) SMEM
            # Per-channel dense (S, 128) planes loaded straight from the ref.
            planes = [x_ref[0, c].astype(jnp.float32) for c in range(C)]
            s = planes[0] * w_ref[0] + b_ref[0]
            for c in range(1, C):
                s = s + planes[c] * w_ref[c]          # scalar * dense-plane FMA
            a = jax.nn.sigmoid(s)                      # (S, 128) f32, EUP exp
            for c in range(C):
                # gate in f32, one cast at the store
                o_ref[0, c] = (planes[c] * a).astype(o_ref.dtype)
        return kernel

    def kernel(x_ref, w_ref, b_ref, o_ref):
        # Large-C path: dynamic per-channel accumulate, no code-size blowup.
        s0 = x_ref[0, 0].astype(jnp.float32) * w_ref[0] + b_ref[0]

        def body(c, acc):
            return acc + x_ref[0, c].astype(jnp.float32) * w_ref[c]

        s = lax.fori_loop(1, C, body, s0)
        a = jax.nn.sigmoid(s)
        o_ref[0] = (x_ref[0].astype(jnp.float32) * a[None, :, :]).astype(o_ref.dtype)
    return kernel


def _plan_tiling(B, C, HW, itemsize):
    """Pick a sublane tile (multiple of 8 or full extent) and padded extent."""
    s_needed = _cdiv(HW, _LANE)                       # sublane rows covering HW
    row_bytes = C * _LANE * itemsize
    s_cap = max(_SUBLANE,
                (_TARGET_BLOCK_BYTES // row_bytes) // _SUBLANE * _SUBLANE)
    # Either one full-extent tile per image (always a legal block) or a capped
    # multiple-of-8 tile (HW gets padded to the tile grid below).
    s_tile = s_needed if s_needed <= s_cap else s_cap
    # Grid-balance for megacore: shrink the tile if the grid has too few steps.
    while B * _cdiv(s_needed, s_tile) < _MIN_GRID_STEPS and s_tile > _SUBLANE:
        half = max(_SUBLANE, (s_tile // 2 // _SUBLANE) * _SUBLANE)
        if half == s_tile:
            break
        s_tile = half
    num_tiles = _cdiv(s_needed, s_tile)
    s_pad = num_tiles * s_tile
    return s_tile, num_tiles, s_pad


@jax.jit
def spatial_attention(x_nchw, weight, bias):
    """x_nchw: [B, C, H, W]; weight: [1, C, 1, 1]; bias: [1]. Returns [B, C, H, W]."""
    B, C, H, W = x_nchw.shape
    HW = H * W
    itemsize = x_nchw.dtype.itemsize

    s_tile, num_tiles, s_pad = _plan_tiling(B, C, HW, itemsize)
    hw_pad = s_pad * _LANE

    x3d = x_nchw.reshape(B, C, HW)
    if hw_pad != HW:                                  # pad spatial axis (zeros)
        x3d = jnp.pad(x3d, ((0, 0), (0, 0), (0, hw_pad - HW)))
    x4d = x3d.reshape(B, C, s_pad, _LANE)             # dense sublane x lane view

    w1d = weight.reshape(C).astype(jnp.float32)       # SMEM scalar weights
    b1d = bias.reshape(1).astype(jnp.float32)

    cost = pl.CostEstimate(
        flops=3 * B * C * hw_pad,                     # C FMAs + gate mul / pixel
        transcendentals=B * hw_pad,                   # one sigmoid / pixel
        bytes_accessed=2 * B * C * hw_pad * itemsize,
    )

    out4d = pl.pallas_call(
        _make_kernel(C),
        out_shape=jax.ShapeDtypeStruct((B, C, s_pad, _LANE), x_nchw.dtype),
        grid_spec=pltpu.PrefetchScalarGridSpec(
            num_scalar_prefetch=0,
            grid=(B, num_tiles),
            in_specs=[
                pl.BlockSpec((1, C, s_tile, _LANE), lambda b, t: (b, 0, t, 0)),
                pl.BlockSpec(memory_space=pltpu.MemorySpace.SMEM),   # weights (C,)
                pl.BlockSpec(memory_space=pltpu.MemorySpace.SMEM),   # bias (1,)
            ],
            out_specs=pl.BlockSpec((1, C, s_tile, _LANE), lambda b, t: (b, 0, t, 0)),
        ),
        compiler_params=pltpu.CompilerParams(
            dimension_semantics=("parallel", "parallel"),
        ),
        input_output_aliases={0: 0},                  # gate is elementwise: in-place safe
        cost_estimate=cost,
    )(x4d, w1d, b1d)

    out3d = out4d.reshape(B, C, hw_pad)
    if hw_pad != HW:
        out3d = out3d[:, :, :HW]
    return out3d.reshape(B, C, H, W)


def _reference(x_nchw, weight, bias):
    # pure-JAX reference of the PyTorch forward
    w = weight.reshape(1, -1, 1, 1)
    att = jnp.sum(x_nchw * w, axis=1, keepdims=True) + bias.reshape(1, 1, 1, 1)
    att = jax.nn.sigmoid(att)
    return x_nchw * att


if __name__ == "__main__":
    key = jax.random.PRNGKey(0)
    kx, kw, kb, kx2 = jax.random.split(key, 4)

    # Primary case: B=2, C=4, 16x16 spatial (HW multiple of 128, no padding path).
    B, C, H, W = 2, 4, 16, 16
    x = jax.random.normal(kx, (B, C, H, W), dtype=jnp.float32)
    weight = jax.random.normal(kw, (1, C, 1, 1), dtype=jnp.float32) * 0.1
    bias = jax.random.normal(kb, (1,), dtype=jnp.float32) * 0.1

    out = jax.block_until_ready(spatial_attention(x, weight, bias))
    ref = _reference(x, weight, bias)
    assert out.shape == (B, C, H, W)
    assert jnp.allclose(out, ref, atol=1e-5, rtol=1e-5), "mismatch vs reference"

    # Robustness case: HW not a multiple of 128 (exercises the padded-tile path).
    B2, C2, H2, W2 = 1, 3, 7, 9
    x2 = jax.random.normal(kx2, (B2, C2, H2, W2), dtype=jnp.float32)
    w2 = jax.random.normal(kw, (1, C2, 1, 1), dtype=jnp.float32) * 0.1
    out2 = jax.block_until_ready(spatial_attention(x2, w2, bias))
    ref2 = _reference(x2, w2, bias)
    assert out2.shape == (B2, C2, H2, W2)
    assert jnp.allclose(out2, ref2, atol=1e-5, rtol=1e-5), "mismatch vs reference (padded)"

    print("KERNEL_OK")
</pallas_src>

<mosaic_0001>
module attributes {stable_mosaic.version = 11 : i64} {
  func.func @kernel(%arg0: i32, %arg1: i32, %arg2: memref<1x4x2x128xf32, #tpu.memory_space<vmem>>, %arg3: memref<4xf32, #tpu.memory_space<smem>>, %arg4: memref<1xf32, #tpu.memory_space<smem>>, %arg5: memref<1x4x2x128xf32, #tpu.memory_space<vmem>>) attributes {dimension_semantics = [#tpu.dimension_semantics<parallel>, #tpu.dimension_semantics<parallel>], iteration_bounds = array<i64: 2, 1>, scalar_prefetch = 0 : i64, scratch_operands = 0 : i64, tpu.core_type = #tpu.core_type<tc>, window_params = [{transform_indices = @transform_0, window_bounds = array<i64: 1, 4, 2, 128>}, {transform_indices = @transform_1, window_bounds = array<i64: 4>}, {transform_indices = @transform_2, window_bounds = array<i64: 1>}, {transform_indices = @transform_3, window_bounds = array<i64: 1, 4, 2, 128>}]} {
    %c0 = arith.constant 0 : index
    %c0_0 = arith.constant 0 : index
    %c0_1 = arith.constant 0 : index
    %c0_2 = arith.constant 0 : index
    %0 = vector.load %arg2[%c0, %c0_0, %c0_1, %c0_2] : memref<1x4x2x128xf32, #tpu.memory_space<vmem>>, vector<1x1x2x128xf32>
    %1 = vector.shape_cast %0 : vector<1x1x2x128xf32> to vector<2x128xf32>
    %c0_3 = arith.constant 0 : index
    %c1 = arith.constant 1 : index
    %c0_4 = arith.constant 0 : index
    %c0_5 = arith.constant 0 : index
    %2 = vector.load %arg2[%c0_3, %c1, %c0_4, %c0_5] : memref<1x4x2x128xf32, #tpu.memory_space<vmem>>, vector<1x1x2x128xf32>
    %3 = vector.shape_cast %2 : vector<1x1x2x128xf32> to vector<2x128xf32>
    %c0_6 = arith.constant 0 : index
    %c2 = arith.constant 2 : index
    %c0_7 = arith.constant 0 : index
    %c0_8 = arith.constant 0 : index
    %4 = vector.load %arg2[%c0_6, %c2, %c0_7, %c0_8] : memref<1x4x2x128xf32, #tpu.memory_space<vmem>>, vector<1x1x2x128xf32>
    %5 = vector.shape_cast %4 : vector<1x1x2x128xf32> to vector<2x128xf32>
    %c0_9 = arith.constant 0 : index
    %c3 = arith.constant 3 : index
    %c0_10 = arith.constant 0 : index
    %c0_11 = arith.constant 0 : index
    %6 = vector.load %arg2[%c0_9, %c3, %c0_10, %c0_11] : memref<1x4x2x128xf32, #tpu.memory_space<vmem>>, vector<1x1x2x128xf32>
    %7 = vector.shape_cast %6 : vector<1x1x2x128xf32> to vector<2x128xf32>
    %c0_12 = arith.constant 0 : index
    %8 = memref.load %arg3[%c0_12] : memref<4xf32, #tpu.memory_space<smem>>
    %9 = vector.broadcast %8 : f32 to vector<2x128xf32>
    %10 = arith.mulf %1, %9 : vector<2x128xf32>
    %c0_13 = arith.constant 0 : index
    %11 = memref.load %arg4[%c0_13] : memref<1xf32, #tpu.memory_space<smem>>
    %12 = vector.broadcast %11 : f32 to vector<2x128xf32>
    %13 = arith.addf %10, %12 : vector<2x128xf32>
    %c1_14 = arith.constant 1 : index
    %14 = memref.load %arg3[%c1_14] : memref<4xf32, #tpu.memory_space<smem>>
    %15 = vector.broadcast %14 : f32 to vector<2x128xf32>
    %16 = arith.mulf %3, %15 : vector<2x128xf32>
    %17 = arith.addf %13, %16 : vector<2x128xf32>
    %c2_15 = arith.constant 2 : index
    %18 = memref.load %arg3[%c2_15] : memref<4xf32, #tpu.memory_space<smem>>
    %19 = vector.broadcast %18 : f32 to vector<2x128xf32>
    %20 = arith.mulf %5, %19 : vector<2x128xf32>
    %21 = arith.addf %17, %20 : vector<2x128xf32>
    %c3_16 = arith.constant 3 : index
    %22 = memref.load %arg3[%c3_16] : memref<4xf32, #tpu.memory_space<smem>>
    %23 = vector.broadcast %22 : f32 to vector<2x128xf32>
    %24 = arith.mulf %7, %23 : vector<2x128xf32>
    %25 = arith.addf %21, %24 : vector<2x128xf32>
    %26 = arith.negf %25 : vector<2x128xf32>
    %27 = math.exp %26 : vector<2x128xf32>
    %cst = arith.constant 1.000000e+00 : f32
    %28 = vector.broadcast %cst : f32 to vector<2x128xf32>
    %29 = arith.addf %28, %27 : vector<2x128xf32>
    %30 = arith.divf %28, %29 : vector<2x128xf32>
    %31 = arith.mulf %1, %30 : vector<2x128xf32>
    %c0_17 = arith.constant 0 : index
    %c0_18 = arith.constant 0 : index
    %c0_19 = arith.constant 0 : index
    %c0_20 = arith.constant 0 : index
    %32 = vector.load %arg5[%c0_17, %c0_18, %c0_19, %c0_20] : memref<1x4x2x128xf32, #tpu.memory_space<vmem>>, vector<1x1x2x128xf32>
    %33 = vector.shape_cast %32 : vector<1x1x2x128xf32> to vector<2x128xf32>
    %34 = vector.shape_cast %31 : vector<2x128xf32> to vector<1x1x2x128xf32>
    tpu.vector_store %arg5[%c0_17, %c0_18, %c0_19, %c0_20], %34 {strides = array<i32>} : memref<1x4x2x128xf32, #tpu.memory_space<vmem>>, vector<1x1x2x128xf32>,
    %35 = arith.mulf %3, %30 : vector<2x128xf32>
    %c0_21 = arith.constant 0 : index
    %c1_22 = arith.constant 1 : index
    %c0_23 = arith.constant 0 : index
    %c0_24 = arith.constant 0 : index
    %36 = vector.load %arg5[%c0_21, %c1_22, %c0_23, %c0_24] : memref<1x4x2x128xf32, #tpu.memory_space<vmem>>, vector<1x1x2x128xf32>
    %37 = vector.shape_cast %36 : vector<1x1x2x128xf32> to vector<2x128xf32>
    %38 = vector.shape_cast %35 : vector<2x128xf32> to vector<1x1x2x128xf32>
    tpu.vector_store %arg5[%c0_21, %c1_22, %c0_23, %c0_24], %38 {strides = array<i32>} : memref<1x4x2x128xf32, #tpu.memory_space<vmem>>, vector<1x1x2x128xf32>,
    %39 = arith.mulf %5, %30 : vector<2x128xf32>
    %c0_25 = arith.constant 0 : index
    %c2_26 = arith.constant 2 : index
    %c0_27 = arith.constant 0 : index
    %c0_28 = arith.constant 0 : index
    %40 = vector.load %arg5[%c0_25, %c2_26, %c0_27, %c0_28] : memref<1x4x2x128xf32, #tpu.memory_space<vmem>>, vector<1x1x2x128xf32>
    %41 = vector.shape_cast %40 : vector<1x1x2x128xf32> to vector<2x128xf32>
    %42 = vector.shape_cast %39 : vector<2x128xf32> to vector<1x1x2x128xf32>
    tpu.vector_store %arg5[%c0_25, %c2_26, %c0_27, %c0_28], %42 {strides = array<i32>} : memref<1x4x2x128xf32, #tpu.memory_space<vmem>>, vector<1x1x2x128xf32>,
    %43 = arith.mulf %7, %30 : vector<2x128xf32>
    %c0_29 = arith.constant 0 : index
    %c3_30 = arith.constant 3 : index
    %c0_31 = arith.constant 0 : index
    %c0_32 = arith.constant 0 : index
    %44 = vector.load %arg5[%c0_29, %c3_30, %c0_31, %c0_32] : memref<1x4x2x128xf32, #tpu.memory_space<vmem>>, vector<1x1x2x128xf32>
    %45 = vector.shape_cast %44 : vector<1x1x2x128xf32> to vector<2x128xf32>
    %46 = vector.shape_cast %43 : vector<2x128xf32> to vector<1x1x2x128xf32>
    tpu.vector_store %arg5[%c0_29, %c3_30, %c0_31, %c0_32], %46 {strides = array<i32>} : memref<1x4x2x128xf32, #tpu.memory_space<vmem>>, vector<1x1x2x128xf32>,
    return
  }
  func.func @transform_0(%arg0: i32, %arg1: i32) -> (i32, i32, i32, i32) {
    %c0_i32 = arith.constant 0 : i32
    %c0_i32_0 = arith.constant 0 : i32
    %c0_i32_1 = arith.constant 0 : i32
    return %arg0, %c0_i32, %arg1, %c0_i32_0 : i32, i32, i32, i32
  }
  func.func @transform_1(%arg0: i32, %arg1: i32) -> i32 {
    %c0_i32 = arith.constant 0 : i32
    %c0_i32_0 = arith.constant 0 : i32
    return %c0_i32 : i32
  }
  func.func @transform_2(%arg0: i32, %arg1: i32) -> i32 {
    %c0_i32 = arith.constant 0 : i32
    %c0_i32_0 = arith.constant 0 : i32
    return %c0_i32 : i32
  }
  func.func @transform_3(%arg0: i32, %arg1: i32) -> (i32, i32, i32, i32) {
    %c0_i32 = arith.constant 0 : i32
    %c0_i32_0 = arith.constant 0 : i32
    %c0_i32_1 = arith.constant 0 : i32
    return %arg0, %c0_i32, %arg1, %c0_i32_0 : i32, i32, i32, i32
  }
}

</mosaic_0001>

<llo_original>
// kernel: spatial_attention.1
$region0: #{spatial_attention.1}
  #allocation0 [shape = 'u32[]', space=smem, size = 0x4, offset = 0x4, fixed_abs, tag = 'smem constant byte address 0x4 - core index']
  #allocation1 [shape = 'u32[144,128]{1,0:T(1,128)}', space=vmem, size = 0x12000, scoped, tag = 'internal scratch']
  #allocation2 [shape = 'f32[1]{0:T(128)S(6)}', space=smem, size = 0x200, scoped, tag = 'scoped memory for spatial_attention.1']
  %s0 = inlined_call_operand.vmem [shape: f32[2,4,2,128], index: 0, kind: input, shape index: {}, may-alias: {0,3}]
  %s1 = inlined_call_operand.vmem [shape: f32[4], index: 1, kind: input, shape index: {}]
  %s2 = inlined_call_operand.<no memory space> [shape: f32[1], index: 2, kind: input, shape index: {}]
  %s3 = inlined_call_operand.vmem [shape: f32[2,4,2,128], index: 3, kind: output, shape index: {}, may-alias: {0,3}]
  %s4 = sld [smem:[#allocation0]]
  $region49: #{spatial_attention.1} parent=0
    _
  %s6 = ssub.s32 1, %s4
  %s7 = scalar_select 0, %s6, %s4
  %8 = sst [smem:[#allocation2]] %s2
  $region1: #{spatial_attention.1} parent=0
    #allocation3 [shape = 'u8[512]{0}', space=smem, size = 0x200, scoped, tag = 'input window, operand 1, single buffered']
    #allocation4 [shape = 's32[2]{0}', space=sflag, size = 0x8, scoped, tag = 'scoped memory for spatial_attention.1']
    %9 = vsyncpa [#allocation4], 0
    loop: start=0, step=1, limit=4
    $region2: #{spatial_attention.1} parent=1 // loop_pre_header
      _
    $region3: #{spatial_attention.1} parent=1 // loop_header
      %s11 = sphi 0, %s15
      %p12 = scmp.ge.s32.totalorder %s11, 4
      %s18 = sphi 0, %s30
      %s19 = sphi 0, %s26
      %s20 = sphi 0, %s18
      %s21 = sphi 0, %s19
      %s22 = sphi 0, %s20
      %s23 = sphi 0, %s21
      %s35 = sphi 0, %s37
      %s38 = sphi 0, %s35
      %s39 = sphi 0, %s38
      %s55 = sphi 0, %s39
      %s59 = sphi 0, %s59
      %s61 = sphi 0, %s59
      %s62 = sphi 0, %s61
      %s76 = sphi 0, %s62
      %s80 = sphi 0, %s80
      %s82 = sphi 0, %s80
      %s83 = sphi 0, %s82
      %s97 = sphi 0, %s83
      %s105 = sphi 0, %s107
      %s108 = sphi 0, %s105
      %s109 = sphi 0, %s108
      %s125 = sphi 0, %s109
    $region4: #{spatial_attention.1} parent=1 // loop_header_branch
      %14 = sbr.rel (%p12) target = $region8
    $region5: #{spatial_attention.1} parent=1 // loop_body
      %s16 = ssub.s32 %s11, 1
      %s17 = ssub.s32 %s11, 2
      %s24 = sadd.s32 1, %s19
      %p25 = scmp.ge.s32.totalorder %s24, 1
      %s26 = scalar_select %p25, 0, %s24
      %s27 = sadd.s32 1, %s18
      %s28 = scalar_select %p25, %s27, %s18
      %p29 = scmp.ge.s32.totalorder %s28, 2
      %s30 = scalar_select %p29, 0, %s28
      %s31 = ssub.s32 %s18, %s30
      %s32 = ssub.s32 %s19, %s26
      %s33 = sor.u32 %s31, %s32
      %p34 = scmp.eq.s32.totalorder %s33, 0
      %s36 = sadd.s32 %s35, 1
      %s37 = scalar_select %p34, %s35, %s36
      %p40 = pneg %p34
      %p41 = scmp.eq.s32.totalorder %s11, 1
      %p42 = por %p40, %p41
      %p43 = scmp.ne.s32.totalorder %s35, %s38
      %p44 = scmp.eq.s32.totalorder %s11, 0
      %p45 = por %p43, %p44
      %p46 = scmp.ne.s32.totalorder %s35, %s38
      %p47 = scmp.eq.s32.totalorder %s16, 1
      %p48 = por %p46, %p47
      %p49 = scmp.ne.s32.totalorder %s38, %s39
      %p50 = scmp.eq.s32.totalorder %s16, 0
      %p51 = por %p49, %p50
      %p52 = scmp.ne.s32.totalorder %s38, %s39
      %p53 = scmp.eq.s32.totalorder %s17, 1
      %p54 = por %p52, %p53
      %p56 = scmp.ne.s32.totalorder %s39, %s55
      %p57 = scmp.eq.s32.totalorder %s17, 0
      %p58 = por %p56, %p57
      %s60 = sadd.s32 %s59, 1
      %p63 = scmp.eq.s32.totalorder %s11, 1
      %p64 = scmp.ne.s32.totalorder %s59, %s61
      %p65 = scmp.eq.s32.totalorder %s11, 0
      %p66 = por %p64, %p65
      %p67 = scmp.ne.s32.totalorder %s59, %s61
      %p68 = scmp.eq.s32.totalorder %s16, 1
      %p69 = por %p67, %p68
      %p70 = scmp.ne.s32.totalorder %s61, %s62
      %p71 = scmp.eq.s32.totalorder %s16, 0
      %p72 = por %p70, %p71
      %p73 = scmp.ne.s32.totalorder %s61, %s62
      %p74 = scmp.eq.s32.totalorder %s17, 1
      %p75 = por %p73, %p74
      %p77 = scmp.ne.s32.totalorder %s62, %s76
      %p78 = scmp.eq.s32.totalorder %s17, 0
      %p79 = por %p77, %p78
      %s81 = sadd.s32 %s80, 1
      %p84 = scmp.eq.s32.totalorder %s11, 1
      %p85 = scmp.ne.s32.totalorder %s80, %s82
      %p86 = scmp.eq.s32.totalorder %s11, 0
      %p87 = por %p85, %p86
      %p88 = scmp.ne.s32.totalorder %s80, %s82
      %p89 = scmp.eq.s32.totalorder %s16, 1
      %p90 = por %p88, %p89
      %p91 = scmp.ne.s32.totalorder %s82, %s83
      %p92 = scmp.eq.s32.totalorder %s16, 0
      %p93 = por %p91, %p92
      %p94 = scmp.ne.s32.totalorder %s82, %s83
      %p95 = scmp.eq.s32.totalorder %s17, 1
      %p96 = por %p94, %p95
      %p98 = scmp.ne.s32.totalorder %s83, %s97
      %p99 = scmp.eq.s32.totalorder %s17, 0
      %p100 = por %p98, %p99
      %s101 = ssub.s32 %s18, %s30
      %s102 = ssub.s32 %s19, %s26
      %s103 = sor.u32 %s101, %s102
      %p104 = scmp.eq.s32.totalorder %s103, 0
      %s106 = sadd.s32 %s105, 1
      %s107 = scalar_select %p104, %s105, %s106
      %p110 = pneg %p104
      %p111 = scmp.eq.s32.totalorder %s11, 1
      %p112 = por %p110, %p111
      %p113 = scmp.ne.s32.totalorder %s105, %s108
      %p114 = scmp.eq.s32.totalorder %s11, 0
      %p115 = por %p113, %p114
      %p116 = scmp.ne.s32.totalorder %s105, %s108
      %p117 = scmp.eq.s32.totalorder %s16, 1
      %p118 = por %p116, %p117
      %p119 = scmp.ne.s32.totalorder %s108, %s109
      %p120 = scmp.eq.s32.totalorder %s16, 0
      %p121 = por %p119, %p120
      %p122 = scmp.ne.s32.totalorder %s108, %s109
      %p123 = scmp.eq.s32.totalorder %s17, 1
      %p124 = por %p122, %p123
      %p126 = scmp.ne.s32.totalorder %s109, %s125
      %p127 = scmp.eq.s32.totalorder %s17, 0
      %p128 = por %p126, %p127
      %p129 = scmp.le.s32.totalorder 1, %s11
      %p130 = scmp.lt.s32.totalorder %s11, 3
      %p131 = pnand %p129, %p130
      %p132 = pneg %p131
      // Predicated region
      $region9: #{spatial_attention.1} parent=5 // pred_check
        _
      $region10: #{spatial_attention.1} parent=5 // pred_check_branch
        %134 = sbr.rel (%p131) target = $region12
      $region11: #{spatial_attention.1} parent=5 // pred_region
        %s135 = ssub.s32 %s11, 1
        // Predicated region
        $region13: #{spatial_attention.1} parent=11 // pred_check
          %p136 = pneg %p72
        $region14: #{spatial_attention.1} parent=11 // pred_check_branch
          %138 = sbr.rel (%p136) target = $region16
        $region15: #{spatial_attention.1} parent=11 // pred_region
          %s140 = ssub.s32 16, 16
          %141 = vsyncadd [#allocation4], %s140
          %s143 = sshll.u32 %s1, 4
          %s144 = int_to_ptr.vmem [resolvable:$true] %s143
          %146 = dma.vmem_to_smem %s144, 16, [#allocation3], [#allocation4]
        $region16: #{spatial_attention.1} parent=11 // pred_fallthru
          _
        // Predicated region
        $region17: #{spatial_attention.1} parent=11 // pred_check
          %p147 = pneg %p93
        $region18: #{spatial_attention.1} parent=11 // pred_check_branch
          %149 = sbr.rel (%p147) target = $region20
        $region19: #{spatial_attention.1} parent=11 // pred_region
          _
        $region20: #{spatial_attention.1} parent=11 // pred_fallthru
          _
      $region12: #{spatial_attention.1} parent=5 // pred_fallthru
        _
      %p150 = scmp.lt.s32.totalorder %s11, 2
      // Predicated region
      $region21: #{spatial_attention.1} parent=5 // pred_check
        %p151 = pneg %p150
      $region22: #{spatial_attention.1} parent=5 // pred_check_branch
        %153 = sbr.rel (%p151) target = $region24
      $region23: #{spatial_attention.1} parent=5 // pred_region
        // Predicated region
        $region25: #{spatial_attention.1} parent=23 // pred_check
          %p154 = pneg %p45
        $region26: #{spatial_attention.1} parent=23 // pred_check_branch
          %156 = sbr.rel (%p154) target = $region28
        $region27: #{spatial_attention.1} parent=23 // pred_region
          %p157 = scmp.lt.s32.totalorder %s18, 1
          %s158 = scalar_select %p157, %s18, 1
          %p159 = scmp.lt.s32.totalorder %s19, 0
          %s160 = scalar_select %p159, %s19, 0
          %s161 = smul.addr %s158, 4
          %s162 = sadd.s32 %s160, %s161
          %s163 = smul.addr %s162, 2
          %s164 = scalar_lea.vmem %s0, %s163
        $region28: #{spatial_attention.1} parent=23 // pred_fallthru
          _
      $region24: #{spatial_attention.1} parent=5 // pred_fallthru
        _
      %p165 = scmp.le.s32.totalorder 1, %s11
      %p166 = scmp.lt.s32.totalorder %s11, 3
      %p167 = pnand %p165, %p166
      %p168 = pneg %p167
      // Predicated region
      $region29: #{spatial_attention.1} parent=5 // pred_check
        _
      $region30: #{spatial_attention.1} parent=5 // pred_check_branch
        %170 = sbr.rel (%p167) target = $region32
      $region31: #{spatial_attention.1} parent=5 // pred_region
        %s171 = ssub.s32 %s11, 1
        // Predicated region
        $region33: #{spatial_attention.1} parent=31 // pred_check
          %p172 = pneg %p72
        $region34: #{spatial_attention.1} parent=31 // pred_check_branch
          %174 = sbr.rel (%p172) target = $region36
        $region35: #{spatial_attention.1} parent=31 // pred_region
          %175 = dma.done [#allocation4], 16
        $region36: #{spatial_attention.1} parent=31 // pred_fallthru
          _
        %176 = sfence
        %p177 = scmp.lt.s32.totalorder %s20, 1
        %s178 = scalar_select %p177, %s20, 1
        %p179 = scmp.lt.s32.totalorder %s21, 0
        %s180 = scalar_select %p179, %s21, 0
        %s181 = smul.addr %s178, 4
        %s182 = sadd.s32 %s180, %s181
        %s183 = smul.addr %s182, 2
        %s184 = scalar_lea.vmem %s0, %s183
        %p185 = pneg %p51
        %p186 = pneg %p48
        %p187 = pneg %p72
        %p188 = pneg %p69
        %p189 = pneg %p93
        %p190 = pneg %p90
        %p191 = pneg %p121
        %p192 = pneg %p118
        %p193 = scmp.lt.s32.totalorder %s20, 1
        %s194 = scalar_select %p193, %s20, 1
        %p195 = scmp.lt.s32.totalorder %s21, 0
        %s196 = scalar_select %p195, %s21, 0
        %s197 = smul.addr %s194, 4
        %s198 = sadd.s32 %s196, %s197
        %s199 = smul.addr %s198, 2
        %s200 = scalar_lea.vmem %s3, %s199
        %p201 = scmp.lt.s32.totalorder %s20, 1
        %s202 = scalar_select %p201, %s20, 1
        %p203 = scmp.lt.s32.totalorder %s21, 0
        %s204 = scalar_select %p203, %s21, 0
        %s205 = smul.addr %s202, 4
        %s206 = sadd.s32 %s204, %s205
        %s207 = smul.addr %s206, 2
        %s208 = scalar_lea.vmem %s0, %s207
        %p209 = scmp.lt.s32.totalorder %s20, 1
        %s210 = scalar_select %p209, %s20, 1
        %p211 = scmp.lt.s32.totalorder %s21, 0
        %s212 = scalar_select %p211, %s21, 0
        %s213 = smul.addr %s210, 4
        %s214 = sadd.s32 %s212, %s213
        %s215 = smul.addr %s214, 2
        %s216 = scalar_lea.vmem %s3, %s215
        %v217 = vld [vmem:[%s208] sm:$0x3]
        %s218 = scalar_lea.vmem %s208, 2
        %v219 = vld [vmem:[%s218] sm:$0x3]
        %s220 = scalar_lea.vmem %s208, 4
        %v221 = vld [vmem:[%s220] sm:$0x3]
        %s222 = scalar_lea.vmem %s208, 6
        %v223 = vld [vmem:[%s222] sm:$0x3]
        %s224 = sld [smem:[#allocation3]]
        %v225 = vstv %s224
        %v226 = vmul.f32 %v217, %v225
        %s227 = sld [smem:[#allocation2]]
        %v228 = vstv %s227
        %v229 = vadd.f32 %v226, %v228
        %s230 = sld [smem:[#allocation3 + $0x1]]
        %v231 = vstv %s230
        %v232 = vmul.f32 %v219, %v231
        %v233 = vadd.f32 %v229, %v232
        %s234 = sld [smem:[#allocation3 + $0x2]]
        %v235 = vstv %s234
        %v236 = vmul.f32 %v221, %v235
        %v237 = vadd.f32 %v233, %v236
        %s238 = sld [smem:[#allocation3 + $0x3]]
        %v239 = vstv %s238
        %v240 = vmul.f32 %v223, %v239
        %v241 = vadd.f32 %v237, %v240
        %v242 = vxor.u32 %v241, 2147483648
        %v243 = vmul.f32 %v242, 1.442695
        %v244 = vpow.pop %v243
        %v245 = vadd.f32 %v244, 1.0
        %v246 = vrcp.pop %v245
        %v247 = vmul.f32 1.0, %v246
        %v248 = vmul.f32 %v217, %v247
        %249 = vst [vmem:[%s216] sm:$0x3] %v248
        %v250 = vmul.f32 %v219, %v247
        %s251 = scalar_lea.vmem %s216, 2
        %252 = vst [vmem:[%s251] sm:$0x3] %v250
        %v253 = vmul.f32 %v221, %v247
        %s254 = scalar_lea.vmem %s216, 4
        %255 = vst [vmem:[%s254] sm:$0x3] %v253
        %v256 = vmul.f32 %v223, %v247
        %s257 = scalar_lea.vmem %s216, 6
        %258 = vst [vmem:[%s257] sm:$0x3] %v256
        %p259 = scmp.lt.s32.totalorder %s20, 1
        %s260 = scalar_select %p259, %s20, 1
        %p261 = scmp.lt.s32.totalorder %s21, 0
        %s262 = scalar_select %p261, %s21, 0
        %s263 = smul.addr %s260, 4
        %s264 = sadd.s32 %s262, %s263
        %s265 = smul.addr %s264, 2
        %s266 = scalar_lea.vmem %s3, %s265
        // Predicated region
        $region37: #{spatial_attention.1} parent=31 // pred_check
          %p267 = pneg %p118
        $region38: #{spatial_attention.1} parent=31 // pred_check_branch
          %269 = sbr.rel (%p267) target = $region40
        $region39: #{spatial_attention.1} parent=31 // pred_region
          _
        $region40: #{spatial_attention.1} parent=31 // pred_fallthru
          _
      $region32: #{spatial_attention.1} parent=5 // pred_fallthru
        _
      %p270 = scmp.le.s32.totalorder 2, %s11
      // Predicated region
      $region41: #{spatial_attention.1} parent=5 // pred_check
        %p271 = pneg %p270
      $region42: #{spatial_attention.1} parent=5 // pred_check_branch
        %273 = sbr.rel (%p271) target = $region44
      $region43: #{spatial_attention.1} parent=5 // pred_region
        %s274 = ssub.s32 %s11, 2
        // Predicated region
        $region45: #{spatial_attention.1} parent=43 // pred_check
          %p275 = pneg %p124
        $region46: #{spatial_attention.1} parent=43 // pred_check_branch
          %277 = sbr.rel (%p275) target = $region48
        $region47: #{spatial_attention.1} parent=43 // pred_region
          %p278 = scmp.lt.s32.totalorder %s22, 1
          %s279 = scalar_select %p278, %s22, 1
          %p280 = scmp.lt.s32.totalorder %s23, 0
          %s281 = scalar_select %p280, %s23, 0
          %s282 = smul.addr %s279, 4
          %s283 = sadd.s32 %s281, %s282
          %s284 = smul.addr %s283, 2
          %s285 = scalar_lea.vmem %s3, %s284
        $region48: #{spatial_attention.1} parent=43 // pred_fallthru
          _
      $region44: #{spatial_attention.1} parent=5 // pred_fallthru
        _
    $region6: #{spatial_attention.1} parent=1 // loop_footer
      %s15 = sadd.s32 1, %s11
    $region7: #{spatial_attention.1} parent=1 // loop_footer_branch
      %10 = sbr.rel target = $region3
    $region8: #{spatial_attention.1} parent=1 // loop_exit
      _
    %286 = vsyncpa [#allocation4], 1
    %s287 = scalar_lea.sflag [#allocation4], 1
    %288 = vsyncpa %s287, 1

</llo_original>
